<compile_context>
chip_gen: v5e
topology: v5e:2x2
jax: 0.10.0
libtpu: 0.0.40
codegen_flags: <defaults>
</compile_context>

<pallas_src>
import jax
import jax.numpy as jnp
from jax.experimental import pallas as pl
from jax.experimental.pallas import tpu as pltpu

# ---- model hyper-parameters (small, consistent with the module) ----------------
B = 2            # batch
T = 8            # sequence length
INPUT_SIZE = 16  # input_size
HIDDEN = 32      # hidden_size
OUTPUT = 4       # output_size

BP = 8                     # batch padded to one sublane group
_2H = 2 * HIDDEN           # 64
_3H = 3 * HIDDEN           # 96

# ---- parameter-slab layout (72 rows x 128 lanes, f32 = 36 KiB) ------------------
SLAB_COLS = 128
R_IHF = 0                          # rows  0..15 : W_ih_f^T  (I, 3H)  cols 0:96
R_IHB = INPUT_SIZE                 # rows 16..31 : W_ih_b^T  (I, 3H)  cols 0:96
R_HH = 2 * INPUT_SIZE              # rows 32..63 : W_hh_f^T  (H, 3H)  cols 0:96
                                   #               fc_w^T[:H]  cols 96:100
                                   #               fc_w^T[H:]  cols 100:104
R_BIAS = R_HH + HIDDEN             # row 64: b_ih_f (0:96), b_fc (96:100)
                                   # row 65: b_hh_f ; row 66: b_ih_b ; row 67: b_hh_b
PARAM_ROWS = 72                    # 68 used rows, padded to a multiple of 8


def _sigmoid1(x):
    """sigmoid(x) = 0.5*tanh(0.5*x) + 0.5  -- one EUP pass + two cheap VPU ops."""
    return 0.5 * jnp.tanh(0.5 * x) + 0.5


def bigru_kernel(x_ref, p_ref, out_ref):
    H, I, O = HIDDEN, INPUT_SIZE, OUTPUT

    # ---- hoisted parameter reads (each read exactly once, reused every step) ---
    w_ih_f  = p_ref[R_IHF:R_IHF + I, 0:_3H]            # (I, 3H)
    w_ih_b  = p_ref[R_IHB:R_IHB + I, 0:_3H]            # (I, 3H)
    w_hh_rz = p_ref[R_HH:R_HH + H, 0:_2H]              # (H, 2H)  r|z halves
    w_hh_n  = p_ref[R_HH:R_HH + H, _2H:_3H]            # (H, H)   n half
    w_fc_f  = p_ref[R_HH:R_HH + H, _3H:_3H + O]        # (H, O)   fc cols for h_f
    w_fc_b  = p_ref[R_HH:R_HH + H, _3H + O:_3H + 2 * O]  # (H, O)  fc cols for h_b
    b_ih_f  = p_ref[R_BIAS:R_BIAS + 1, 0:_3H]          # (1, 3H)
    b_fc    = p_ref[R_BIAS:R_BIAS + 1, _3H:_3H + O]    # (1, O)
    b_hh_f  = p_ref[R_BIAS + 1:R_BIAS + 2, 0:_3H]      # (1, 3H)
    b_ih_b  = p_ref[R_BIAS + 2:R_BIAS + 3, 0:_3H]      # (1, 3H)
    b_hh_b  = p_ref[R_BIAS + 3:R_BIAS + 4, 0:_3H]      # (1, 3H)

    x = x_ref[...]                                     # (T*BP, I) time-major rows

    # ---- forward input projection hoisted out of the recurrence (ONE matmul) ---
    gi_f = jnp.dot(x, w_ih_f, preferred_element_type=jnp.float32) + b_ih_f  # (T*BP,3H)
    # b_hh for the r/z gates is a flat additive term -> fold it in once, here.
    gi_rz_all = gi_f[:, 0:_2H] + b_hh_f[:, 0:_2H]      # (T*BP, 2H)
    gi_n_all  = gi_f[:, _2H:_3H]                       # (T*BP, H)
    # pre-broadcast the recurrent n-bias once (broadcast_in_dim is not CSE'd)
    bhh_n = jnp.broadcast_to(b_hh_f[:, _2H:_3H], (BP, H))

    # ---- forward recurrence: only the (BP,H)@(H,*) matmuls are serialized ------
    h = jnp.zeros((BP, H), jnp.float32)
    for t in range(T):                                 # static unroll, T is small
        lo = t * BP
        gi_rz = gi_rz_all[lo:lo + BP]                  # vreg-aligned free slice
        gi_n  = gi_n_all[lo:lo + BP]
        gh_rz = jnp.dot(h, w_hh_rz, preferred_element_type=jnp.float32)
        gh_n  = jnp.dot(h, w_hh_n, preferred_element_type=jnp.float32) + bhh_n
        s = _sigmoid1(gi_rz + gh_rz)                   # fused r & z: one EUP pass
        r = s[:, 0:H]                                  # lane offset 0
        z = s[:, H:_2H]
        n = jnp.tanh(gi_n + r * gh_n)                  # r and gh_n both offset 0
        h = n + z * (h - n)
    h_f = h

    # ---- backward direction, only at sequence position T-1 ---------------------
    # The reverse GRU's output at t=T-1 is its first step from h0=0, so
    # gh = 0 @ Whh_b^T + b_hh_b = b_hh_b: no matmul, pure VPU/EUP work.
    x_last = x[(T - 1) * BP:T * BP, :]
    gi_b = jnp.dot(x_last, w_ih_b, preferred_element_type=jnp.float32) + b_ih_b
    s_b = _sigmoid1(gi_b[:, 0:_2H] + b_hh_b[:, 0:_2H])
    r_b = s_b[:, 0:H]
    z_b = s_b[:, H:_2H]
    n_b = jnp.tanh(gi_b[:, _2H:_3H]
                   + r_b * jnp.broadcast_to(b_hh_b[:, _2H:_3H], (BP, H)))
    h_b = n_b - z_b * n_b                              # (1-z)*n, h_prev = 0

    # ---- fc: split matmuls avoid concatenating h_f / h_b ------------------------
    out = (jnp.dot(h_f, w_fc_f, preferred_element_type=jnp.float32)
           + jnp.dot(h_b, w_fc_b, preferred_element_type=jnp.float32)
           + b_fc)                                     # (BP, O)
    out_ref[...] = out[0:B, :].astype(out_ref.dtype)


def pack_params(params):
    """Build the (72,128) f32 parameter slab ONCE (outside the per-call path)."""
    (wih_f, whh_f, bih_f, bhh_f,
     wih_b, whh_b, bih_b, bhh_b,
     fc_w, fc_b) = params
    del whh_b   # never needed: backward output at T-1 starts from h0 = 0
    H, I, O = HIDDEN, INPUT_SIZE, OUTPUT

    slab = jnp.zeros((PARAM_ROWS, SLAB_COLS), jnp.float32)
    slab = slab.at[R_IHF:R_IHF + I, 0:_3H].set(wih_f.T)
    slab = slab.at[R_IHB:R_IHB + I, 0:_3H].set(wih_b.T)
    slab = slab.at[R_HH:R_HH + H, 0:_3H].set(whh_f.T)
    slab = slab.at[R_HH:R_HH + H, _3H:_3H + O].set(fc_w[:, :H].T)       # h_f half
    slab = slab.at[R_HH:R_HH + H, _3H + O:_3H + 2 * O].set(fc_w[:, H:].T)  # h_b half
    slab = slab.at[R_BIAS, 0:_3H].set(bih_f)
    slab = slab.at[R_BIAS, _3H:_3H + O].set(fc_b)
    slab = slab.at[R_BIAS + 1, 0:_3H].set(bhh_f)
    slab = slab.at[R_BIAS + 2, 0:_3H].set(bih_b)
    slab = slab.at[R_BIAS + 3, 0:_3H].set(bhh_b)
    return slab


@jax.jit
def bigru_forward(x, slab):
    """x: (B, T, I) float32, slab: pre-packed params -> (B, OUTPUT) float32."""
    assert x.shape == (B, T, INPUT_SIZE), f"expected {(B, T, INPUT_SIZE)}, got {x.shape}"
    assert slab.shape == (PARAM_ROWS, SLAB_COLS)

    # pad batch to one sublane group and flatten time-major: fuses to one XLA copy
    xp = jnp.pad(x, ((0, BP - B), (0, 0), (0, 0)))            # (BP, T, I)
    x_tm = jnp.transpose(xp, (1, 0, 2)).reshape(T * BP, INPUT_SIZE)   # (T*BP, I)

    vmem = pl.BlockSpec(memory_space=pltpu.MemorySpace.VMEM)
    return pl.pallas_call(
        bigru_kernel,
        out_shape=jax.ShapeDtypeStruct((B, OUTPUT), jnp.float32),
        in_specs=[vmem, vmem],
        out_specs=vmem,
    )(x_tm, slab)


def init_params(key):
    """PyTorch-shaped params: GRU U(-1/sqrt(H), 1/sqrt(H)), Linear U(-1/sqrt(fan_in))."""
    ks = jax.random.split(key, 10)
    k_gru = 1.0 / jnp.sqrt(HIDDEN)
    k_fc = 1.0 / jnp.sqrt(2 * HIDDEN)

    def u(k, shape, bound):
        return jax.random.uniform(k, shape, jnp.float32, -bound, bound)

    wih_f = u(ks[0], (3 * HIDDEN, INPUT_SIZE), k_gru)   # weight_ih_l0
    whh_f = u(ks[1], (3 * HIDDEN, HIDDEN), k_gru)       # weight_hh_l0
    bih_f = u(ks[2], (3 * HIDDEN,), k_gru)              # bias_ih_l0
    bhh_f = u(ks[3], (3 * HIDDEN,), k_gru)              # bias_hh_l0
    wih_b = u(ks[4], (3 * HIDDEN, INPUT_SIZE), k_gru)   # weight_ih_l0_reverse
    whh_b = u(ks[5], (3 * HIDDEN, HIDDEN), k_gru)       # weight_hh_l0_reverse
    bih_b = u(ks[6], (3 * HIDDEN,), k_gru)              # bias_ih_l0_reverse
    bhh_b = u(ks[7], (3 * HIDDEN,), k_gru)              # bias_hh_l0_reverse
    fc_w = u(ks[8], (OUTPUT, 2 * HIDDEN), k_fc)         # fc.weight
    fc_b = u(ks[9], (OUTPUT,), k_fc)                    # fc.bias
    return (wih_f, whh_f, bih_f, bhh_f, wih_b, whh_b, bih_b, bhh_b, fc_w, fc_b)


def reference_forward(x, params):
    """Pure-JAX reference of the PyTorch forward (full bidirectional GRU + fc)."""
    (wih_f, whh_f, bih_f, bhh_f,
     wih_b, whh_b, bih_b, bhh_b,
     fc_w, fc_b) = params
    H = HIDDEN

    def cell(x_t, h, wih, whh, bih, bhh):
        gi = x_t @ wih.T + bih
        gh = h @ whh.T + bhh
        r = jax.nn.sigmoid(gi[:, :H] + gh[:, :H])
        z = jax.nn.sigmoid(gi[:, H:2 * H] + gh[:, H:2 * H])
        n = jnp.tanh(gi[:, 2 * H:] + r * gh[:, 2 * H:])
        return (1 - z) * n + z * h

    # forward direction
    h_f = jnp.zeros((x.shape[0], H), jnp.float32)
    for t in range(T):
        h_f = cell(x[:, t, :], h_f, wih_f, whh_f, bih_f, bhh_f)
    # backward direction: full reverse recurrence, keep the output at position T-1
    h_b = jnp.zeros((x.shape[0], H), jnp.float32)
    out_b_last = None
    for t in reversed(range(T)):
        h_b = cell(x[:, t, :], h_b, wih_b, whh_b, bih_b, bhh_b)
        if t == T - 1:
            out_b_last = h_b
    feat = jnp.concatenate([h_f, out_b_last], axis=1)
    return feat @ fc_w.T + fc_b


if __name__ == "__main__":
    key = jax.random.PRNGKey(0)
    kx, kp = jax.random.split(key)
    x = jax.random.normal(kx, (B, T, INPUT_SIZE), jnp.float32)
    params = init_params(kp)

    slab = pack_params(params)        # one-time packing, outside the per-call path
    out = jax.block_until_ready(bigru_forward(x, slab))
    ref = reference_forward(x, params)

    assert out.shape == (B, OUTPUT)
    assert jnp.allclose(out, ref, atol=1e-4, rtol=1e-4)

    print("KERNEL_OK")
</pallas_src>

<mosaic_0001>
module attributes {stable_mosaic.version = 11 : i64} {
  func.func @bigru_kernel(%arg0: memref<64x16xf32, #tpu.memory_space<vmem>>, %arg1: memref<72x128xf32, #tpu.memory_space<vmem>>, %arg2: memref<2x4xf32, #tpu.memory_space<vmem>>) attributes {dimension_semantics = [], scalar_prefetch = 0 : i64, scratch_operands = 0 : i64, tpu.core_type = #tpu.core_type<tc>} {
    %c0 = arith.constant 0 : index
    %c0_0 = arith.constant 0 : index
    %0 = vector.load %arg1[%c0, %c0_0] : memref<72x128xf32, #tpu.memory_space<vmem>>, vector<16x96xf32>
    %c16 = arith.constant 16 : index
    %c0_1 = arith.constant 0 : index
    %1 = vector.load %arg1[%c16, %c0_1] : memref<72x128xf32, #tpu.memory_space<vmem>>, vector<16x96xf32>
    %c32 = arith.constant 32 : index
    %c0_2 = arith.constant 0 : index
    %2 = vector.load %arg1[%c32, %c0_2] : memref<72x128xf32, #tpu.memory_space<vmem>>, vector<32x64xf32>
    %c32_3 = arith.constant 32 : index
    %c64 = arith.constant 64 : index
    %3 = vector.load %arg1[%c32_3, %c64] : memref<72x128xf32, #tpu.memory_space<vmem>>, vector<32x32xf32>
    %c32_4 = arith.constant 32 : index
    %c96 = arith.constant 96 : index
    %4 = vector.load %arg1[%c32_4, %c96] : memref<72x128xf32, #tpu.memory_space<vmem>>, vector<32x4xf32>
    %c32_5 = arith.constant 32 : index
    %c100 = arith.constant 100 : index
    %5 = vector.load %arg1[%c32_5, %c100] : memref<72x128xf32, #tpu.memory_space<vmem>>, vector<32x4xf32>
    %c64_6 = arith.constant 64 : index
    %c0_7 = arith.constant 0 : index
    %6 = vector.load %arg1[%c64_6, %c0_7] : memref<72x128xf32, #tpu.memory_space<vmem>>, vector<1x96xf32>
    %c64_8 = arith.constant 64 : index
    %c96_9 = arith.constant 96 : index
    %7 = vector.load %arg1[%c64_8, %c96_9] : memref<72x128xf32, #tpu.memory_space<vmem>>, vector<1x4xf32>
    %c65 = arith.constant 65 : index
    %c0_10 = arith.constant 0 : index
    %8 = vector.load %arg1[%c65, %c0_10] : memref<72x128xf32, #tpu.memory_space<vmem>>, vector<1x96xf32>
    %c66 = arith.constant 66 : index
    %c0_11 = arith.constant 0 : index
    %9 = vector.load %arg1[%c66, %c0_11] : memref<72x128xf32, #tpu.memory_space<vmem>>, vector<1x96xf32>
    %c67 = arith.constant 67 : index
    %c0_12 = arith.constant 0 : index
    %10 = vector.load %arg1[%c67, %c0_12] : memref<72x128xf32, #tpu.memory_space<vmem>>, vector<1x96xf32>
    %c0_13 = arith.constant 0 : index
    %c0_14 = arith.constant 0 : index
    %11 = vector.load %arg0[%c0_13, %c0_14] : memref<64x16xf32, #tpu.memory_space<vmem>>, vector<64x16xf32>
    %cst = arith.constant dense<0.000000e+00> : vector<64x96xf32>
    %12 = tpu.matmul %11, %0, %cst {dimension_numbers = #tpu.dot_dimension_numbers<[1], [0], [0], [1], [0, 0, 1, 1], [], []>} : vector<64x16xf32>, vector<16x96xf32>, vector<64x96xf32> -> vector<64x96xf32>
    %13 = vector.broadcast %6 : vector<1x96xf32> to vector<64x96xf32>
    %14 = arith.addf %12, %13 : vector<64x96xf32>
    %15 = vector.extract_strided_slice %14 {offsets = [0, 0], sizes = [64, 64], strides = [1, 1]} : vector<64x96xf32> to vector<64x64xf32>
    %16 = vector.extract_strided_slice %8 {offsets = [0, 0], sizes = [1, 64], strides = [1, 1]} : vector<1x96xf32> to vector<1x64xf32>
    %17 = vector.broadcast %16 : vector<1x64xf32> to vector<64x64xf32>
    %18 = arith.addf %15, %17 : vector<64x64xf32>
    %19 = vector.extract_strided_slice %14 {offsets = [0, 64], sizes = [64, 32], strides = [1, 1]} : vector<64x96xf32> to vector<64x32xf32>
    %20 = vector.extract_strided_slice %8 {offsets = [0, 64], sizes = [1, 32], strides = [1, 1]} : vector<1x96xf32> to vector<1x32xf32>
    %21 = vector.shape_cast %20 : vector<1x32xf32> to vector<1x32xf32>
    %22 = vector.broadcast %21 : vector<1x32xf32> to vector<8x32xf32>
    %cst_15 = arith.constant 0.000000e+00 : f32
    %23 = vector.broadcast %cst_15 : f32 to vector<8x32xf32>
    %24 = vector.extract_strided_slice %18 {offsets = [0, 0], sizes = [8, 64], strides = [1, 1]} : vector<64x64xf32> to vector<8x64xf32>
    %25 = vector.extract_strided_slice %19 {offsets = [0, 0], sizes = [8, 32], strides = [1, 1]} : vector<64x32xf32> to vector<8x32xf32>
    %cst_16 = arith.constant dense<0.000000e+00> : vector<8x64xf32>
    %26 = tpu.matmul %23, %2, %cst_16 {dimension_numbers = #tpu.dot_dimension_numbers<[1], [0], [0], [1], [0, 0, 1, 1], [], []>} : vector<8x32xf32>, vector<32x64xf32>, vector<8x64xf32> -> vector<8x64xf32>
    %cst_17 = arith.constant dense<0.000000e+00> : vector<8x32xf32>
    %27 = tpu.matmul %23, %3, %cst_17 {dimension_numbers = #tpu.dot_dimension_numbers<[1], [0], [0], [1], [0, 0, 1, 1], [], []>} : vector<8x32xf32>, vector<32x32xf32>, vector<8x32xf32> -> vector<8x32xf32>
    %28 = arith.addf %27, %22 : vector<8x32xf32>
    %29 = arith.addf %24, %26 : vector<8x64xf32>
    %cst_18 = arith.constant 5.000000e-01 : f32
    %30 = vector.broadcast %cst_18 : f32 to vector<8x64xf32>
    %31 = arith.mulf %30, %29 : vector<8x64xf32>
    %32 = math.tanh %31 : vector<8x64xf32>
    %cst_19 = arith.constant 5.000000e-01 : f32
    %33 = vector.broadcast %cst_19 : f32 to vector<8x64xf32>
    %34 = arith.mulf %33, %32 : vector<8x64xf32>
    %cst_20 = arith.constant 5.000000e-01 : f32
    %35 = vector.broadcast %cst_20 : f32 to vector<8x64xf32>
    %36 = arith.addf %34, %35 : vector<8x64xf32>
    %37 = vector.extract_strided_slice %36 {offsets = [0, 0], sizes = [8, 32], strides = [1, 1]} : vector<8x64xf32> to vector<8x32xf32>
    %38 = vector.extract_strided_slice %36 {offsets = [0, 32], sizes = [8, 32], strides = [1, 1]} : vector<8x64xf32> to vector<8x32xf32>
    %39 = arith.mulf %37, %28 : vector<8x32xf32>
    %40 = arith.addf %25, %39 : vector<8x32xf32>
    %41 = math.tanh %40 : vector<8x32xf32>
    %42 = arith.subf %23, %41 : vector<8x32xf32>
    %43 = arith.mulf %38, %42 : vector<8x32xf32>
    %44 = arith.addf %41, %43 : vector<8x32xf32>
    %45 = vector.extract_strided_slice %18 {offsets = [8, 0], sizes = [8, 64], strides = [1, 1]} : vector<64x64xf32> to vector<8x64xf32>
    %46 = vector.extract_strided_slice %19 {offsets = [8, 0], sizes = [8, 32], strides = [1, 1]} : vector<64x32xf32> to vector<8x32xf32>
    %cst_21 = arith.constant dense<0.000000e+00> : vector<8x64xf32>
    %47 = tpu.matmul %44, %2, %cst_21 {dimension_numbers = #tpu.dot_dimension_numbers<[1], [0], [0], [1], [0, 0, 1, 1], [], []>} : vector<8x32xf32>, vector<32x64xf32>, vector<8x64xf32> -> vector<8x64xf32>
    %cst_22 = arith.constant dense<0.000000e+00> : vector<8x32xf32>
    %48 = tpu.matmul %44, %3, %cst_22 {dimension_numbers = #tpu.dot_dimension_numbers<[1], [0], [0], [1], [0, 0, 1, 1], [], []>} : vector<8x32xf32>, vector<32x32xf32>, vector<8x32xf32> -> vector<8x32xf32>
    %49 = arith.addf %48, %22 : vector<8x32xf32>
    %50 = arith.addf %45, %47 : vector<8x64xf32>
    %cst_23 = arith.constant 5.000000e-01 : f32
    %51 = vector.broadcast %cst_23 : f32 to vector<8x64xf32>
    %52 = arith.mulf %51, %50 : vector<8x64xf32>
    %53 = math.tanh %52 : vector<8x64xf32>
    %cst_24 = arith.constant 5.000000e-01 : f32
    %54 = vector.broadcast %cst_24 : f32 to vector<8x64xf32>
    %55 = arith.mulf %54, %53 : vector<8x64xf32>
    %cst_25 = arith.constant 5.000000e-01 : f32
    %56 = vector.broadcast %cst_25 : f32 to vector<8x64xf32>
    %57 = arith.addf %55, %56 : vector<8x64xf32>
    %58 = vector.extract_strided_slice %57 {offsets = [0, 0], sizes = [8, 32], strides = [1, 1]} : vector<8x64xf32> to vector<8x32xf32>
    %59 = vector.extract_strided_slice %57 {offsets = [0, 32], sizes = [8, 32], strides = [1, 1]} : vector<8x64xf32> to vector<8x32xf32>
    %60 = arith.mulf %58, %49 : vector<8x32xf32>
    %61 = arith.addf %46, %60 : vector<8x32xf32>
    %62 = math.tanh %61 : vector<8x32xf32>
    %63 = arith.subf %44, %62 : vector<8x32xf32>
    %64 = arith.mulf %59, %63 : vector<8x32xf32>
    %65 = arith.addf %62, %64 : vector<8x32xf32>
    %66 = vector.extract_strided_slice %18 {offsets = [16, 0], sizes = [8, 64], strides = [1, 1]} : vector<64x64xf32> to vector<8x64xf32>
    %67 = vector.extract_strided_slice %19 {offsets = [16, 0], sizes = [8, 32], strides = [1, 1]} : vector<64x32xf32> to vector<8x32xf32>
    %cst_26 = arith.constant dense<0.000000e+00> : vector<8x64xf32>
    %68 = tpu.matmul %65, %2, %cst_26 {dimension_numbers = #tpu.dot_dimension_numbers<[1], [0], [0], [1], [0, 0, 1, 1], [], []>} : vector<8x32xf32>, vector<32x64xf32>, vector<8x64xf32> -> vector<8x64xf32>
    %cst_27 = arith.constant dense<0.000000e+00> : vector<8x32xf32>
    %69 = tpu.matmul %65, %3, %cst_27 {dimension_numbers = #tpu.dot_dimension_numbers<[1], [0], [0], [1], [0, 0, 1, 1], [], []>} : vector<8x32xf32>, vector<32x32xf32>, vector<8x32xf32> -> vector<8x32xf32>
    %70 = arith.addf %69, %22 : vector<8x32xf32>
    %71 = arith.addf %66, %68 : vector<8x64xf32>
    %cst_28 = arith.constant 5.000000e-01 : f32
    %72 = vector.broadcast %cst_28 : f32 to vector<8x64xf32>
    %73 = arith.mulf %72, %71 : vector<8x64xf32>
    %74 = math.tanh %73 : vector<8x64xf32>
    %cst_29 = arith.constant 5.000000e-01 : f32
    %75 = vector.broadcast %cst_29 : f32 to vector<8x64xf32>
    %76 = arith.mulf %75, %74 : vector<8x64xf32>
    %cst_30 = arith.constant 5.000000e-01 : f32
    %77 = vector.broadcast %cst_30 : f32 to vector<8x64xf32>
    %78 = arith.addf %76, %77 : vector<8x64xf32>
    %79 = vector.extract_strided_slice %78 {offsets = [0, 0], sizes = [8, 32], strides = [1, 1]} : vector<8x64xf32> to vector<8x32xf32>
    %80 = vector.extract_strided_slice %78 {offsets = [0, 32], sizes = [8, 32], strides = [1, 1]} : vector<8x64xf32> to vector<8x32xf32>
    %81 = arith.mulf %79, %70 : vector<8x32xf32>
    %82 = arith.addf %67, %81 : vector<8x32xf32>
    %83 = math.tanh %82 : vector<8x32xf32>
    %84 = arith.subf %65, %83 : vector<8x32xf32>
    %85 = arith.mulf %80, %84 : vector<8x32xf32>
    %86 = arith.addf %83, %85 : vector<8x32xf32>
    %87 = vector.extract_strided_slice %18 {offsets = [24, 0], sizes = [8, 64], strides = [1, 1]} : vector<64x64xf32> to vector<8x64xf32>
    %88 = vector.extract_strided_slice %19 {offsets = [24, 0], sizes = [8, 32], strides = [1, 1]} : vector<64x32xf32> to vector<8x32xf32>
    %cst_31 = arith.constant dense<0.000000e+00> : vector<8x64xf32>
    %89 = tpu.matmul %86, %2, %cst_31 {dimension_numbers = #tpu.dot_dimension_numbers<[1], [0], [0], [1], [0, 0, 1, 1], [], []>} : vector<8x32xf32>, vector<32x64xf32>, vector<8x64xf32> -> vector<8x64xf32>
    %cst_32 = arith.constant dense<0.000000e+00> : vector<8x32xf32>
    %90 = tpu.matmul %86, %3, %cst_32 {dimension_numbers = #tpu.dot_dimension_numbers<[1], [0], [0], [1], [0, 0, 1, 1], [], []>} : vector<8x32xf32>, vector<32x32xf32>, vector<8x32xf32> -> vector<8x32xf32>
    %91 = arith.addf %90, %22 : vector<8x32xf32>
    %92 = arith.addf %87, %89 : vector<8x64xf32>
    %cst_33 = arith.constant 5.000000e-01 : f32
    %93 = vector.broadcast %cst_33 : f32 to vector<8x64xf32>
    %94 = arith.mulf %93, %92 : vector<8x64xf32>
    %95 = math.tanh %94 : vector<8x64xf32>
    %cst_34 = arith.constant 5.000000e-01 : f32
    %96 = vector.broadcast %cst_34 : f32 to vector<8x64xf32>
    %97 = arith.mulf %96, %95 : vector<8x64xf32>
    %cst_35 = arith.constant 5.000000e-01 : f32
    %98 = vector.broadcast %cst_35 : f32 to vector<8x64xf32>
    %99 = arith.addf %97, %98 : vector<8x64xf32>
    %100 = vector.extract_strided_slice %99 {offsets = [0, 0], sizes = [8, 32], strides = [1, 1]} : vector<8x64xf32> to vector<8x32xf32>
    %101 = vector.extract_strided_slice %99 {offsets = [0, 32], sizes = [8, 32], strides = [1, 1]} : vector<8x64xf32> to vector<8x32xf32>
    %102 = arith.mulf %100, %91 : vector<8x32xf32>
    %103 = arith.addf %88, %102 : vector<8x32xf32>
    %104 = math.tanh %103 : vector<8x32xf32>
    %105 = arith.subf %86, %104 : vector<8x32xf32>
    %106 = arith.mulf %101, %105 : vector<8x32xf32>
    %107 = arith.addf %104, %106 : vector<8x32xf32>
    %108 = vector.extract_strided_slice %18 {offsets = [32, 0], sizes = [8, 64], strides = [1, 1]} : vector<64x64xf32> to vector<8x64xf32>
    %109 = vector.extract_strided_slice %19 {offsets = [32, 0], sizes = [8, 32], strides = [1, 1]} : vector<64x32xf32> to vector<8x32xf32>
    %cst_36 = arith.constant dense<0.000000e+00> : vector<8x64xf32>
    %110 = tpu.matmul %107, %2, %cst_36 {dimension_numbers = #tpu.dot_dimension_numbers<[1], [0], [0], [1], [0, 0, 1, 1], [], []>} : vector<8x32xf32>, vector<32x64xf32>, vector<8x64xf32> -> vector<8x64xf32>
    %cst_37 = arith.constant dense<0.000000e+00> : vector<8x32xf32>
    %111 = tpu.matmul %107, %3, %cst_37 {dimension_numbers = #tpu.dot_dimension_numbers<[1], [0], [0], [1], [0, 0, 1, 1], [], []>} : vector<8x32xf32>, vector<32x32xf32>, vector<8x32xf32> -> vector<8x32xf32>
    %112 = arith.addf %111, %22 : vector<8x32xf32>
    %113 = arith.addf %108, %110 : vector<8x64xf32>
    %cst_38 = arith.constant 5.000000e-01 : f32
    %114 = vector.broadcast %cst_38 : f32 to vector<8x64xf32>
    %115 = arith.mulf %114, %113 : vector<8x64xf32>
    %116 = math.tanh %115 : vector<8x64xf32>
    %cst_39 = arith.constant 5.000000e-01 : f32
    %117 = vector.broadcast %cst_39 : f32 to vector<8x64xf32>
    %118 = arith.mulf %117, %116 : vector<8x64xf32>
    %cst_40 = arith.constant 5.000000e-01 : f32
    %119 = vector.broadcast %cst_40 : f32 to vector<8x64xf32>
    %120 = arith.addf %118, %119 : vector<8x64xf32>
    %121 = vector.extract_strided_slice %120 {offsets = [0, 0], sizes = [8, 32], strides = [1, 1]} : vector<8x64xf32> to vector<8x32xf32>
    %122 = vector.extract_strided_slice %120 {offsets = [0, 32], sizes = [8, 32], strides = [1, 1]} : vector<8x64xf32> to vector<8x32xf32>
    %123 = arith.mulf %121, %112 : vector<8x32xf32>
    %124 = arith.addf %109, %123 : vector<8x32xf32>
    %125 = math.tanh %124 : vector<8x32xf32>
    %126 = arith.subf %107, %125 : vector<8x32xf32>
    %127 = arith.mulf %122, %126 : vector<8x32xf32>
    %128 = arith.addf %125, %127 : vector<8x32xf32>
    %129 = vector.extract_strided_slice %18 {offsets = [40, 0], sizes = [8, 64], strides = [1, 1]} : vector<64x64xf32> to vector<8x64xf32>
    %130 = vector.extract_strided_slice %19 {offsets = [40, 0], sizes = [8, 32], strides = [1, 1]} : vector<64x32xf32> to vector<8x32xf32>
    %cst_41 = arith.constant dense<0.000000e+00> : vector<8x64xf32>
    %131 = tpu.matmul %128, %2, %cst_41 {dimension_numbers = #tpu.dot_dimension_numbers<[1], [0], [0], [1], [0, 0, 1, 1], [], []>} : vector<8x32xf32>, vector<32x64xf32>, vector<8x64xf32> -> vector<8x64xf32>
    %cst_42 = arith.constant dense<0.000000e+00> : vector<8x32xf32>
    %132 = tpu.matmul %128, %3, %cst_42 {dimension_numbers = #tpu.dot_dimension_numbers<[1], [0], [0], [1], [0, 0, 1, 1], [], []>} : vector<8x32xf32>, vector<32x32xf32>, vector<8x32xf32> -> vector<8x32xf32>
    %133 = arith.addf %132, %22 : vector<8x32xf32>
    %134 = arith.addf %129, %131 : vector<8x64xf32>
    %cst_43 = arith.constant 5.000000e-01 : f32
    %135 = vector.broadcast %cst_43 : f32 to vector<8x64xf32>
    %136 = arith.mulf %135, %134 : vector<8x64xf32>
    %137 = math.tanh %136 : vector<8x64xf32>
    %cst_44 = arith.constant 5.000000e-01 : f32
    %138 = vector.broadcast %cst_44 : f32 to vector<8x64xf32>
    %139 = arith.mulf %138, %137 : vector<8x64xf32>
    %cst_45 = arith.constant 5.000000e-01 : f32
    %140 = vector.broadcast %cst_45 : f32 to vector<8x64xf32>
    %141 = arith.addf %139, %140 : vector<8x64xf32>
    %142 = vector.extract_strided_slice %141 {offsets = [0, 0], sizes = [8, 32], strides = [1, 1]} : vector<8x64xf32> to vector<8x32xf32>
    %143 = vector.extract_strided_slice %141 {offsets = [0, 32], sizes = [8, 32], strides = [1, 1]} : vector<8x64xf32> to vector<8x32xf32>
    %144 = arith.mulf %142, %133 : vector<8x32xf32>
    %145 = arith.addf %130, %144 : vector<8x32xf32>
    %146 = math.tanh %145 : vector<8x32xf32>
    %147 = arith.subf %128, %146 : vector<8x32xf32>
    %148 = arith.mulf %143, %147 : vector<8x32xf32>
    %149 = arith.addf %146, %148 : vector<8x32xf32>
    %150 = vector.extract_strided_slice %18 {offsets = [48, 0], sizes = [8, 64], strides = [1, 1]} : vector<64x64xf32> to vector<8x64xf32>
    %151 = vector.extract_strided_slice %19 {offsets = [48, 0], sizes = [8, 32], strides = [1, 1]} : vector<64x32xf32> to vector<8x32xf32>
    %cst_46 = arith.constant dense<0.000000e+00> : vector<8x64xf32>
    %152 = tpu.matmul %149, %2, %cst_46 {dimension_numbers = #tpu.dot_dimension_numbers<[1], [0], [0], [1], [0, 0, 1, 1], [], []>} : vector<8x32xf32>, vector<32x64xf32>, vector<8x64xf32> -> vector<8x64xf32>
    %cst_47 = arith.constant dense<0.000000e+00> : vector<8x32xf32>
    %153 = tpu.matmul %149, %3, %cst_47 {dimension_numbers = #tpu.dot_dimension_numbers<[1], [0], [0], [1], [0, 0, 1, 1], [], []>} : vector<8x32xf32>, vector<32x32xf32>, vector<8x32xf32> -> vector<8x32xf32>
    %154 = arith.addf %153, %22 : vector<8x32xf32>
    %155 = arith.addf %150, %152 : vector<8x64xf32>
    %cst_48 = arith.constant 5.000000e-01 : f32
    %156 = vector.broadcast %cst_48 : f32 to vector<8x64xf32>
    %157 = arith.mulf %156, %155 : vector<8x64xf32>
    %158 = math.tanh %157 : vector<8x64xf32>
    %cst_49 = arith.constant 5.000000e-01 : f32
    %159 = vector.broadcast %cst_49 : f32 to vector<8x64xf32>
    %160 = arith.mulf %159, %158 : vector<8x64xf32>
    %cst_50 = arith.constant 5.000000e-01 : f32
    %161 = vector.broadcast %cst_50 : f32 to vector<8x64xf32>
    %162 = arith.addf %160, %161 : vector<8x64xf32>
    %163 = vector.extract_strided_slice %162 {offsets = [0, 0], sizes = [8, 32], strides = [1, 1]} : vector<8x64xf32> to vector<8x32xf32>
    %164 = vector.extract_strided_slice %162 {offsets = [0, 32], sizes = [8, 32], strides = [1, 1]} : vector<8x64xf32> to vector<8x32xf32>
    %165 = arith.mulf %163, %154 : vector<8x32xf32>
    %166 = arith.addf %151, %165 : vector<8x32xf32>
    %167 = math.tanh %166 : vector<8x32xf32>
    %168 = arith.subf %149, %167 : vector<8x32xf32>
    %169 = arith.mulf %164, %168 : vector<8x32xf32>
    %170 = arith.addf %167, %169 : vector<8x32xf32>
    %171 = vector.extract_strided_slice %18 {offsets = [56, 0], sizes = [8, 64], strides = [1, 1]} : vector<64x64xf32> to vector<8x64xf32>
    %172 = vector.extract_strided_slice %19 {offsets = [56, 0], sizes = [8, 32], strides = [1, 1]} : vector<64x32xf32> to vector<8x32xf32>
    %cst_51 = arith.constant dense<0.000000e+00> : vector<8x64xf32>
    %173 = tpu.matmul %170, %2, %cst_51 {dimension_numbers = #tpu.dot_dimension_numbers<[1], [0], [0], [1], [0, 0, 1, 1], [], []>} : vector<8x32xf32>, vector<32x64xf32>, vector<8x64xf32> -> vector<8x64xf32>
    %cst_52 = arith.constant dense<0.000000e+00> : vector<8x32xf32>
    %174 = tpu.matmul %170, %3, %cst_52 {dimension_numbers = #tpu.dot_dimension_numbers<[1], [0], [0], [1], [0, 0, 1, 1], [], []>} : vector<8x32xf32>, vector<32x32xf32>, vector<8x32xf32> -> vector<8x32xf32>
    %175 = arith.addf %174, %22 : vector<8x32xf32>
    %176 = arith.addf %171, %173 : vector<8x64xf32>
    %cst_53 = arith.constant 5.000000e-01 : f32
    %177 = vector.broadcast %cst_53 : f32 to vector<8x64xf32>
    %178 = arith.mulf %177, %176 : vector<8x64xf32>
    %179 = math.tanh %178 : vector<8x64xf32>
    %cst_54 = arith.constant 5.000000e-01 : f32
    %180 = vector.broadcast %cst_54 : f32 to vector<8x64xf32>
    %181 = arith.mulf %180, %179 : vector<8x64xf32>
    %cst_55 = arith.constant 5.000000e-01 : f32
    %182 = vector.broadcast %cst_55 : f32 to vector<8x64xf32>
    %183 = arith.addf %181, %182 : vector<8x64xf32>
    %184 = vector.extract_strided_slice %183 {offsets = [0, 0], sizes = [8, 32], strides = [1, 1]} : vector<8x64xf32> to vector<8x32xf32>
    %185 = vector.extract_strided_slice %183 {offsets = [0, 32], sizes = [8, 32], strides = [1, 1]} : vector<8x64xf32> to vector<8x32xf32>
    %186 = arith.mulf %184, %175 : vector<8x32xf32>
    %187 = arith.addf %172, %186 : vector<8x32xf32>
    %188 = math.tanh %187 : vector<8x32xf32>
    %189 = arith.subf %170, %188 : vector<8x32xf32>
    %190 = arith.mulf %185, %189 : vector<8x32xf32>
    %191 = arith.addf %188, %190 : vector<8x32xf32>
    %192 = vector.extract_strided_slice %11 {offsets = [56, 0], sizes = [8, 16], strides = [1, 1]} : vector<64x16xf32> to vector<8x16xf32>
    %cst_56 = arith.constant dense<0.000000e+00> : vector<8x96xf32>
    %193 = tpu.matmul %192, %1, %cst_56 {dimension_numbers = #tpu.dot_dimension_numbers<[1], [0], [0], [1], [0, 0, 1, 1], [], []>} : vector<8x16xf32>, vector<16x96xf32>, vector<8x96xf32> -> vector<8x96xf32>
    %194 = vector.broadcast %9 : vector<1x96xf32> to vector<8x96xf32>
    %195 = arith.addf %193, %194 : vector<8x96xf32>
    %196 = vector.extract_strided_slice %195 {offsets = [0, 0], sizes = [8, 64], strides = [1, 1]} : vector<8x96xf32> to vector<8x64xf32>
    %197 = vector.extract_strided_slice %10 {offsets = [0, 0], sizes = [1, 64], strides = [1, 1]} : vector<1x96xf32> to vector<1x64xf32>
    %198 = vector.broadcast %197 : vector<1x64xf32> to vector<8x64xf32>
    %199 = arith.addf %196, %198 : vector<8x64xf32>
    %cst_57 = arith.constant 5.000000e-01 : f32
    %200 = vector.broadcast %cst_57 : f32 to vector<8x64xf32>
    %201 = arith.mulf %200, %199 : vector<8x64xf32>
    %202 = math.tanh %201 : vector<8x64xf32>
    %cst_58 = arith.constant 5.000000e-01 : f32
    %203 = vector.broadcast %cst_58 : f32 to vector<8x64xf32>
    %204 = arith.mulf %203, %202 : vector<8x64xf32>
    %cst_59 = arith.constant 5.000000e-01 : f32
    %205 = vector.broadcast %cst_59 : f32 to vector<8x64xf32>
    %206 = arith.addf %204, %205 : vector<8x64xf32>
    %207 = vector.extract_strided_slice %206 {offsets = [0, 0], sizes = [8, 32], strides = [1, 1]} : vector<8x64xf32> to vector<8x32xf32>
    %208 = vector.extract_strided_slice %206 {offsets = [0, 32], sizes = [8, 32], strides = [1, 1]} : vector<8x64xf32> to vector<8x32xf32>
    %209 = vector.extract_strided_slice %195 {offsets = [0, 64], sizes = [8, 32], strides = [1, 1]} : vector<8x96xf32> to vector<8x32xf32>
    %210 = vector.extract_strided_slice %10 {offsets = [0, 64], sizes = [1, 32], strides = [1, 1]} : vector<1x96xf32> to vector<1x32xf32>
    %211 = vector.shape_cast %210 : vector<1x32xf32> to vector<1x32xf32>
    %212 = vector.broadcast %211 : vector<1x32xf32> to vector<8x32xf32>
    %213 = arith.mulf %207, %212 : vector<8x32xf32>
    %214 = arith.addf %209, %213 : vector<8x32xf32>
    %215 = math.tanh %214 : vector<8x32xf32>
    %216 = arith.mulf %208, %215 : vector<8x32xf32>
    %217 = arith.subf %215, %216 : vector<8x32xf32>
    %cst_60 = arith.constant dense<0.000000e+00> : vector<8x4xf32>
    %218 = tpu.matmul %191, %4, %cst_60 {dimension_numbers = #tpu.dot_dimension_numbers<[1], [0], [0], [1], [0, 0, 1, 1], [], []>} : vector<8x32xf32>, vector<32x4xf32>, vector<8x4xf32> -> vector<8x4xf32>
    %cst_61 = arith.constant dense<0.000000e+00> : vector<8x4xf32>
    %219 = tpu.matmul %217, %5, %cst_61 {dimension_numbers = #tpu.dot_dimension_numbers<[1], [0], [0], [1], [0, 0, 1, 1], [], []>} : vector<8x32xf32>, vector<32x4xf32>, vector<8x4xf32> -> vector<8x4xf32>
    %220 = arith.addf %218, %219 : vector<8x4xf32>
    %221 = vector.broadcast %7 : vector<1x4xf32> to vector<8x4xf32>
    %222 = arith.addf %220, %221 : vector<8x4xf32>
    %223 = vector.extract_strided_slice %222 {offsets = [0, 0], sizes = [2, 4], strides = [1, 1]} : vector<8x4xf32> to vector<2x4xf32>
    %c0_62 = arith.constant 0 : index
    %c0_63 = arith.constant 0 : index
    %224 = vector.load %arg2[%c0_62, %c0_63] : memref<2x4xf32, #tpu.memory_space<vmem>>, vector<2x4xf32>
    tpu.vector_store %arg2[%c0_62, %c0_63], %223 {strides = array<i32>} : memref<2x4xf32, #tpu.memory_space<vmem>>, vector<2x4xf32>,
    return
  }
}

</mosaic_0001>

<llo_original>
// kernel: bigru_forward.1
$region0: #{bigru_forward.1}
  #allocation0 [shape = 'u32[]', space=smem, size = 0x4, offset = 0x4, fixed_abs, tag = 'smem constant byte address 0x4 - core index']
  #allocation1 [shape = 'u32[72,128]{1,0:T(1,128)}', space=vmem, size = 0x9000, scoped, tag = 'internal scratch']
  %s0 = inlined_call_operand.vmem [shape: f32[64,16], index: 0, kind: input, shape index: {}]
  %s1 = inlined_call_operand.vmem [shape: f32[72,128], index: 1, kind: input, shape index: {}]
  %s2 = inlined_call_operand.hbm [shape: f32[2,4], index: 2, kind: output, shape index: {}]
  %s3 = sld [smem:[#allocation0]]
  $region18: #{bigru_forward.1} parent=0
    _
  %s5 = ssub.s32 1, %s3
  %s6 = scalar_select 0, %s5, %s3
  $region1: #{bigru_forward.1} parent=0
    #allocation2 [shape = 'u8[1024]{0}', space=vmem, size = 0x400, scoped, tag = 'output window, operand 0, single buffered']
    #allocation3 [shape = 's32[1]{0}', space=sflag, size = 0x4, scoped, tag = 'scoped memory for bigru_forward.1']
    %7 = vsyncpa [#allocation3], 0
    // Predicated region
    $region2: #{bigru_forward.1} parent=1 // pred_check
      _
    $region3: #{bigru_forward.1} parent=1 // pred_check_branch
      %9 = sbr.rel (0) target = $region5
    $region4: #{bigru_forward.1} parent=1 // pred_region
      _
    $region5: #{bigru_forward.1} parent=1 // pred_fallthru
      _
    // Predicated region
    $region6: #{bigru_forward.1} parent=1 // pred_check
      _
    $region7: #{bigru_forward.1} parent=1 // pred_check_branch
      %11 = sbr.rel (0) target = $region9
    $region8: #{bigru_forward.1} parent=1 // pred_region
      _
    $region9: #{bigru_forward.1} parent=1 // pred_fallthru
      _
    %v12 = vld [vmem:[%s1] sm:$0xff]
    %v13 = vld [vmem:[%s1 + $0x8] sm:$0xff]
    %v14 = vld [vmem:[%s1 + $0x10] sm:$0xff]
    %v15 = vld [vmem:[%s1 + $0x18] sm:$0xff]
    %v16 = vld [vmem:[%s1 + $0x20] sm:$0xff]
    %v17 = vld [vmem:[%s1 + $0x28] sm:$0xff]
    %v18 = vld [vmem:[%s1 + $0x30] sm:$0xff]
    %v19 = vld [vmem:[%s1 + $0x38] sm:$0xff]
    %v20 = vld [vmem:[%s1 + $0x40] sm:$0x1]
    %v21 = vld [vmem:[%s1 + $0x41] sm:$0x1]
    %v22 = vld [vmem:[%s1 + $0x42] sm:$0x1]
    %v23 = vld [vmem:[%s1 + $0x43] sm:$0x1]
    %v24 = vld [vmem:[%s0] sm:$0xff]
    %v25 = vld [vmem:[%s0 + $0x8] sm:$0xff]
    %v26 = vld [vmem:[%s0 + $0x10] sm:$0xff]
    %v27 = vld [vmem:[%s0 + $0x18] sm:$0xff]
    %v28 = vld [vmem:[%s0 + $0x20] sm:$0xff]
    %v29 = vld [vmem:[%s0 + $0x28] sm:$0xff]
    %v30 = vld [vmem:[%s0 + $0x30] sm:$0xff]
    %v31 = vld [vmem:[%s0 + $0x38] sm:$0xff]
    %v32 = vperm.slane %v20, 0
    %vm33 = vcmask 130048
    %v35 = vsel %vm33, %v24, 0
    %v38 = vsel %vm33, %v25, 0
    %v41 = vsel %vm33, %v26, 0
    %v44 = vsel %vm33, %v27, 0
    %v47 = vsel %vm33, %v28, 0
    %v50 = vsel %vm33, %v29, 0
    %v53 = vsel %vm33, %v30, 0
    %v56 = vsel %vm33, %v31, 0
    %58 = vmatpush.msra.mxu0 0.0
    %59 = vmatpush.msra.mxu0 0.0
    %60 = vmatpush.msra.mxu0 0.0
    %61 = vmatpush.msra.mxu0 0.0
    %62 = vmatpush.msra.mxu0 0.0
    %63 = vmatpush.msra.mxu0 0.0
    %64 = vmatpush.msra.mxu0 0.0
    %65 = vmatpush.msra.mxu0 0.0
    %66 = vmatpush.msra.mxu0 0.0
    %67 = vmatpush.msra.mxu0 0.0
    %68 = vmatpush.msra.mxu0 0.0
    %69 = vmatpush.msra.mxu0 0.0
    %70 = vmatpush.msra.mxu0 0.0
    %71 = vmatpush.msra.mxu0 0.0
    %72 = vmatpush.msra.mxu0 %v13
    %73 = vmatpush.msra.mxu0 %v12
    %74 = vmatmul.f32.gmra.mxu0 %v35
    %v75 = vpop.f32.mrf.mxu0
    %v76 = vadd.f32 %v32, %v75
    %77 = vmatmul.f32.gmra.mxu0 %v38
    %v78 = vpop.f32.mrf.mxu0
    %v79 = vadd.f32 %v32, %v78
    %80 = vmatmul.f32.gmra.mxu0 %v41
    %v81 = vpop.f32.mrf.mxu0
    %v82 = vadd.f32 %v32, %v81
    %83 = vmatmul.f32.gmra.mxu0 %v44
    %v84 = vpop.f32.mrf.mxu0
    %v85 = vadd.f32 %v32, %v84
    %86 = vmatmul.f32.gmra.mxu0 %v47
    %v87 = vpop.f32.mrf.mxu0
    %v88 = vadd.f32 %v32, %v87
    %89 = vmatmul.f32.gmra.mxu0 %v50
    %v90 = vpop.f32.mrf.mxu0
    %v91 = vadd.f32 %v32, %v90
    %92 = vmatmul.f32.gmra.mxu0 %v53
    %v93 = vpop.f32.mrf.mxu0
    %v94 = vadd.f32 %v32, %v93
    %95 = vmatmul.f32.gmra.mxu0 %v56
    %v96 = vpop.f32.mrf.mxu0
    %v97 = vadd.f32 %v32, %v96
    %98 = vdwg.mxu0
    %v99 = vperm.slane %v21, 0
    %v100 = vadd.f32 %v76, %v99
    %v101 = vadd.f32 %v79, %v99
    %v102 = vadd.f32 %v82, %v99
    %v103 = vadd.f32 %v85, %v99
    %v104 = vadd.f32 %v88, %v99
    %v105 = vadd.f32 %v91, %v99
    %v106 = vadd.f32 %v94, %v99
    %v107 = vadd.f32 %v97, %v99
    %vm108 = vcmask 261120
    %v110 = vsel %vm108, 0.0, 0
    %112 = vmatpush.msra.mxu0 0.0
    %113 = vmatpush.msra.mxu0 0.0
    %114 = vmatpush.msra.mxu0 0.0
    %115 = vmatpush.msra.mxu0 0.0
    %116 = vmatpush.msra.mxu0 0.0
    %117 = vmatpush.msra.mxu0 0.0
    %118 = vmatpush.msra.mxu0 0.0
    %119 = vmatpush.msra.mxu0 0.0
    %120 = vmatpush.msra.mxu0 0.0
    %121 = vmatpush.msra.mxu0 0.0
    %122 = vmatpush.msra.mxu0 0.0
    %123 = vmatpush.msra.mxu0 0.0
    %124 = vmatpush.msra.mxu0 %v19
    %125 = vmatpush.msra.mxu0 %v18
    %126 = vmatpush.msra.mxu0 %v17
    %127 = vmatpush.msra.mxu0 %v16
    %128 = vmatmul.f32.gmra.mxu0 %v110
    %v129 = vpop.f32.mrf.mxu0
    %v130 = vadd.f32 0.0, %v129
    %131 = vdwg.mxu0
    %136 = vrot.lane.b32.xlu0 %v16, 64
    %v137 = vpop.permute.xlu0 %136
    %138 = vrot.lane.b32.xlu0 %v17, 64
    %v139 = vpop.permute.xlu0 %138
    %140 = vrot.lane.b32.xlu0 %v18, 64
    %v141 = vpop.permute.xlu0 %140
    %142 = vrot.lane.b32.xlu0 %v19, 64
    %v143 = vpop.permute.xlu0 %142
    %149 = vrot.lane.b32.xlu0 %v99, 64
    %v150 = vpop.permute.xlu0 %149
    %152 = vmatpush.msra.mxu0 0.0
    %153 = vmatpush.msra.mxu0 0.0
    %154 = vmatpush.msra.mxu0 0.0
    %155 = vmatpush.msra.mxu0 0.0
    %156 = vmatpush.msra.mxu0 0.0
    %157 = vmatpush.msra.mxu0 0.0
    %158 = vmatpush.msra.mxu0 0.0
    %159 = vmatpush.msra.mxu0 0.0
    %160 = vmatpush.msra.mxu0 0.0
    %161 = vmatpush.msra.mxu0 0.0
    %162 = vmatpush.msra.mxu0 0.0
    %163 = vmatpush.msra.mxu0 0.0
    %164 = vmatpush.msra.mxu0 %v143
    %165 = vmatpush.msra.mxu0 %v141
    %166 = vmatpush.msra.mxu0 %v139
    %167 = vmatpush.msra.mxu0 %v137
    %168 = vmatmul.f32.gmra.mxu0 %v110
    %v169 = vpop.f32.mrf.mxu0
    %v170 = vadd.f32 %v150, %v169
    %171 = vdwg.mxu0
    %v172 = vadd.f32 %v100, %v130
    %v173 = vmul.f32 %v172, 0.5
    %v174 = vtanh.pop %v173
    %v175 = vmul.f32 %v174, 0.5
    %v176 = vadd.f32 %v175, 0.5
    %v177 = vmul.f32 %v176, %v170
    %179 = vrot.lane.b32.xlu0 %v177, 64
    %v180 = vpop.permute.xlu0 %179
    %v182 = vadd.f32 %v76, %v180
    %v183 = vtanh.pop %v182
    %v184 = vsub.f32 0.0, %v183
    %186 = vrot.lane.b32.xlu0 %v184, 96
    %v187 = vpop.permute.xlu0 %186
    %v189 = vmul.f32 %v176, %v187
    %191 = vrot.lane.b32.xlu0 %v189, 32
    %v192 = vpop.permute.xlu0 %191
    %v194 = vadd.f32 %v183, %v192
    %196 = vrot.lane.b32.xlu0 %v194, 64
    %v197 = vpop.permute.xlu0 %196
    %v198 = vsel %vm108, %v197, 0
    %200 = vmatpush.msra.mxu0 0.0
    %201 = vmatpush.msra.mxu0 0.0
    %202 = vmatpush.msra.mxu0 0.0
    %203 = vmatpush.msra.mxu0 0.0
    %204 = vmatpush.msra.mxu0 0.0
    %205 = vmatpush.msra.mxu0 0.0
    %206 = vmatpush.msra.mxu0 0.0
    %207 = vmatpush.msra.mxu0 0.0
    %208 = vmatpush.msra.mxu0 0.0
    %209 = vmatpush.msra.mxu0 0.0
    %210 = vmatpush.msra.mxu0 0.0
    %211 = vmatpush.msra.mxu0 0.0
    %212 = vmatpush.msra.mxu0 %v19
    %213 = vmatpush.msra.mxu0 %v18
    %214 = vmatpush.msra.mxu0 %v17
    %215 = vmatpush.msra.mxu0 %v16
    %216 = vmatmul.f32.gmra.mxu0 %v198
    %v217 = vpop.f32.mrf.mxu0
    %v218 = vadd.f32 0.0, %v217
    %219 = vdwg.mxu0
    %220 = vmatpush.msra.mxu0 0.0
    %221 = vmatpush.msra.mxu0 0.0
    %222 = vmatpush.msra.mxu0 0.0
    %223 = vmatpush.msra.mxu0 0.0
    %224 = vmatpush.msra.mxu0 0.0
    %225 = vmatpush.msra.mxu0 0.0
    %226 = vmatpush.msra.mxu0 0.0
    %227 = vmatpush.msra.mxu0 0.0
    %228 = vmatpush.msra.mxu0 0.0
    %229 = vmatpush.msra.mxu0 0.0
    %230 = vmatpush.msra.mxu0 0.0
    %231 = vmatpush.msra.mxu0 0.0
    %232 = vmatpush.msra.mxu0 %v143
    %233 = vmatpush.msra.mxu0 %v141
    %234 = vmatpush.msra.mxu0 %v139
    %235 = vmatpush.msra.mxu0 %v137
    %236 = vmatmul.f32.gmra.mxu0 %v198
    %v237 = vpop.f32.mrf.mxu0
    %v238 = vadd.f32 %v150, %v237
    %239 = vdwg.mxu0
    %v240 = vadd.f32 %v101, %v218
    %v241 = vmul.f32 %v240, 0.5
    %v242 = vtanh.pop %v241
    %v243 = vmul.f32 %v242, 0.5
    %v244 = vadd.f32 %v243, 0.5
    %v245 = vmul.f32 %v244, %v238
    %247 = vrot.lane.b32.xlu0 %v245, 64
    %v248 = vpop.permute.xlu0 %247
    %v250 = vadd.f32 %v79, %v248
    %v251 = vtanh.pop %v250
    %v252 = vsub.f32 %v194, %v251
    %254 = vrot.lane.b32.xlu0 %v252, 96
    %v255 = vpop.permute.xlu0 %254
    %v257 = vmul.f32 %v244, %v255
    %259 = vrot.lane.b32.xlu0 %v257, 32
    %v260 = vpop.permute.xlu0 %259
    %v262 = vadd.f32 %v251, %v260
    %264 = vrot.lane.b32.xlu0 %v262, 64
    %v265 = vpop.permute.xlu0 %264
    %v266 = vsel %vm108, %v265, 0
    %268 = vmatpush.msra.mxu0 0.0
    %269 = vmatpush.msra.mxu0 0.0
    %270 = vmatpush.msra.mxu0 0.0
    %271 = vmatpush.msra.mxu0 0.0
    %272 = vmatpush.msra.mxu0 0.0
    %273 = vmatpush.msra.mxu0 0.0
    %274 = vmatpush.msra.mxu0 0.0
    %275 = vmatpush.msra.mxu0 0.0
    %276 = vmatpush.msra.mxu0 0.0
    %277 = vmatpush.msra.mxu0 0.0
    %278 = vmatpush.msra.mxu0 0.0
    %279 = vmatpush.msra.mxu0 0.0
    %280 = vmatpush.msra.mxu0 %v19
    %281 = vmatpush.msra.mxu0 %v18
    %282 = vmatpush.msra.mxu0 %v17
    %283 = vmatpush.msra.mxu0 %v16
    %284 = vmatmul.f32.gmra.mxu0 %v266
    %v285 = vpop.f32.mrf.mxu0
    %v286 = vadd.f32 0.0, %v285
    %287 = vdwg.mxu0
    %288 = vmatpush.msra.mxu0 0.0
    %289 = vmatpush.msra.mxu0 0.0
    %290 = vmatpush.msra.mxu0 0.0
    %291 = vmatpush.msra.mxu0 0.0
    %292 = vmatpush.msra.mxu0 0.0
    %293 = vmatpush.msra.mxu0 0.0
    %294 = vmatpush.msra.mxu0 0.0
    %295 = vmatpush.msra.mxu0 0.0
    %296 = vmatpush.msra.mxu0 0.0
    %297 = vmatpush.msra.mxu0 0.0
    %298 = vmatpush.msra.mxu0 0.0
    %299 = vmatpush.msra.mxu0 0.0
    %300 = vmatpush.msra.mxu0 %v143
    %301 = vmatpush.msra.mxu0 %v141
    %302 = vmatpush.msra.mxu0 %v139
    %303 = vmatpush.msra.mxu0 %v137
    %304 = vmatmul.f32.gmra.mxu0 %v266
    %v305 = vpop.f32.mrf.mxu0
    %v306 = vadd.f32 %v150, %v305
    %307 = vdwg.mxu0
    %v308 = vadd.f32 %v102, %v286
    %v309 = vmul.f32 %v308, 0.5
    %v310 = vtanh.pop %v309
    %v311 = vmul.f32 %v310, 0.5
    %v312 = vadd.f32 %v311, 0.5
    %v313 = vmul.f32 %v312, %v306
    %315 = vrot.lane.b32.xlu0 %v313, 64
    %v316 = vpop.permute.xlu0 %315
    %v318 = vadd.f32 %v82, %v316
    %v319 = vtanh.pop %v318
    %v320 = vsub.f32 %v262, %v319
    %322 = vrot.lane.b32.xlu0 %v320, 96
    %v323 = vpop.permute.xlu0 %322
    %v325 = vmul.f32 %v312, %v323
    %327 = vrot.lane.b32.xlu0 %v325, 32
    %v328 = vpop.permute.xlu0 %327
    %v330 = vadd.f32 %v319, %v328
    %332 = vrot.lane.b32.xlu0 %v330, 64
    %v333 = vpop.permute.xlu0 %332
    %v334 = vsel %vm108, %v333, 0
    %336 = vmatpush.msra.mxu0 0.0
    %337 = vmatpush.msra.mxu0 0.0
    %338 = vmatpush.msra.mxu0 0.0
    %339 = vmatpush.msra.mxu0 0.0
    %340 = vmatpush.msra.mxu0 0.0
    %341 = vmatpush.msra.mxu0 0.0
    %342 = vmatpush.msra.mxu0 0.0
    %343 = vmatpush.msra.mxu0 0.0
    %344 = vmatpush.msra.mxu0 0.0
    %345 = vmatpush.msra.mxu0 0.0
    %346 = vmatpush.msra.mxu0 0.0
    %347 = vmatpush.msra.mxu0 0.0
    %348 = vmatpush.msra.mxu0 %v19
    %349 = vmatpush.msra.mxu0 %v18
    %350 = vmatpush.msra.mxu0 %v17
    %351 = vmatpush.msra.mxu0 %v16
    %352 = vmatmul.f32.gmra.mxu0 %v334
    %v353 = vpop.f32.mrf.mxu0
    %v354 = vadd.f32 0.0, %v353
    %355 = vdwg.mxu0
    %356 = vmatpush.msra.mxu0 0.0
    %357 = vmatpush.msra.mxu0 0.0
    %358 = vmatpush.msra.mxu0 0.0
    %359 = vmatpush.msra.mxu0 0.0
    %360 = vmatpush.msra.mxu0 0.0
    %361 = vmatpush.msra.mxu0 0.0
    %362 = vmatpush.msra.mxu0 0.0
    %363 = vmatpush.msra.mxu0 0.0
    %364 = vmatpush.msra.mxu0 0.0
    %365 = vmatpush.msra.mxu0 0.0
    %366 = vmatpush.msra.mxu0 0.0
    %367 = vmatpush.msra.mxu0 0.0
    %368 = vmatpush.msra.mxu0 %v143
    %369 = vmatpush.msra.mxu0 %v141
    %370 = vmatpush.msra.mxu0 %v139
    %371 = vmatpush.msra.mxu0 %v137
    %372 = vmatmul.f32.gmra.mxu0 %v334
    %v373 = vpop.f32.mrf.mxu0
    %v374 = vadd.f32 %v150, %v373
    %375 = vdwg.mxu0
    %v376 = vadd.f32 %v103, %v354
    %v377 = vmul.f32 %v376, 0.5
    %v378 = vtanh.pop %v377
    %v379 = vmul.f32 %v378, 0.5
    %v380 = vadd.f32 %v379, 0.5
    %v381 = vmul.f32 %v380, %v374
    %383 = vrot.lane.b32.xlu0 %v381, 64
    %v384 = vpop.permute.xlu0 %383
    %v386 = vadd.f32 %v85, %v384
    %v387 = vtanh.pop %v386
    %v388 = vsub.f32 %v330, %v387
    %390 = vrot.lane.b32.xlu0 %v388, 96
    %v391 = vpop.permute.xlu0 %390
    %v393 = vmul.f32 %v380, %v391
    %395 = vrot.lane.b32.xlu0 %v393, 32
    %v396 = vpop.permute.xlu0 %395
    %v398 = vadd.f32 %v387, %v396
    %400 = vrot.lane.b32.xlu0 %v398, 64
    %v401 = vpop.permute.xlu0 %400
    %v402 = vsel %vm108, %v401, 0
    %404 = vmatpush.msra.mxu0 0.0
    %405 = vmatpush.msra.mxu0 0.0
    %406 = vmatpush.msra.mxu0 0.0
    %407 = vmatpush.msra.mxu0 0.0
    %408 = vmatpush.msra.mxu0 0.0
    %409 = vmatpush.msra.mxu0 0.0
    %410 = vmatpush.msra.mxu0 0.0
    %411 = vmatpush.msra.mxu0 0.0
    %412 = vmatpush.msra.mxu0 0.0
    %413 = vmatpush.msra.mxu0 0.0
    %414 = vmatpush.msra.mxu0 0.0
    %415 = vmatpush.msra.mxu0 0.0
    %416 = vmatpush.msra.mxu0 %v19
    %417 = vmatpush.msra.mxu0 %v18
    %418 = vmatpush.msra.mxu0 %v17
    %419 = vmatpush.msra.mxu0 %v16
    %420 = vmatmul.f32.gmra.mxu0 %v402
    %v421 = vpop.f32.mrf.mxu0
    %v422 = vadd.f32 0.0, %v421
    %423 = vdwg.mxu0
    %424 = vmatpush.msra.mxu0 0.0
    %425 = vmatpush.msra.mxu0 0.0
    %426 = vmatpush.msra.mxu0 0.0
    %427 = vmatpush.msra.mxu0 0.0
    %428 = vmatpush.msra.mxu0 0.0
    %429 = vmatpush.msra.mxu0 0.0
    %430 = vmatpush.msra.mxu0 0.0
    %431 = vmatpush.msra.mxu0 0.0
    %432 = vmatpush.msra.mxu0 0.0
    %433 = vmatpush.msra.mxu0 0.0
    %434 = vmatpush.msra.mxu0 0.0
    %435 = vmatpush.msra.mxu0 0.0
    %436 = vmatpush.msra.mxu0 %v143
    %437 = vmatpush.msra.mxu0 %v141
    %438 = vmatpush.msra.mxu0 %v139
    %439 = vmatpush.msra.mxu0 %v137
    %440 = vmatmul.f32.gmra.mxu0 %v402
    %v441 = vpop.f32.mrf.mxu0
    %v442 = vadd.f32 %v150, %v441
    %443 = vdwg.mxu0
    %v444 = vadd.f32 %v104, %v422
    %v445 = vmul.f32 %v444, 0.5
    %v446 = vtanh.pop %v445
    %v447 = vmul.f32 %v446, 0.5
    %v448 = vadd.f32 %v447, 0.5
    %v449 = vmul.f32 %v448, %v442
    %451 = vrot.lane.b32.xlu0 %v449, 64
    %v452 = vpop.permute.xlu0 %451
    %v454 = vadd.f32 %v88, %v452
    %v455 = vtanh.pop %v454
    %v456 = vsub.f32 %v398, %v455
    %458 = vrot.lane.b32.xlu0 %v456, 96
    %v459 = vpop.permute.xlu0 %458
    %v461 = vmul.f32 %v448, %v459
    %463 = vrot.lane.b32.xlu0 %v461, 32
    %v464 = vpop.permute.xlu0 %463
    %v466 = vadd.f32 %v455, %v464
    %468 = vrot.lane.b32.xlu0 %v466, 64
    %v469 = vpop.permute.xlu0 %468
    %v470 = vsel %vm108, %v469, 0
    %472 = vmatpush.msra.mxu0 0.0
    %473 = vmatpush.msra.mxu0 0.0
    %474 = vmatpush.msra.mxu0 0.0
    %475 = vmatpush.msra.mxu0 0.0
    %476 = vmatpush.msra.mxu0 0.0
    %477 = vmatpush.msra.mxu0 0.0
    %478 = vmatpush.msra.mxu0 0.0
    %479 = vmatpush.msra.mxu0 0.0
    %480 = vmatpush.msra.mxu0 0.0
    %481 = vmatpush.msra.mxu0 0.0
    %482 = vmatpush.msra.mxu0 0.0
    %483 = vmatpush.msra.mxu0 0.0
    %484 = vmatpush.msra.mxu0 %v19
    %485 = vmatpush.msra.mxu0 %v18
    %486 = vmatpush.msra.mxu0 %v17
    %487 = vmatpush.msra.mxu0 %v16
    %488 = vmatmul.f32.gmra.mxu0 %v470
    %v489 = vpop.f32.mrf.mxu0
    %v490 = vadd.f32 0.0, %v489
    %491 = vdwg.mxu0
    %492 = vmatpush.msra.mxu0 0.0
    %493 = vmatpush.msra.mxu0 0.0
    %494 = vmatpush.msra.mxu0 0.0
    %495 = vmatpush.msra.mxu0 0.0
    %496 = vmatpush.msra.mxu0 0.0
    %497 = vmatpush.msra.mxu0 0.0
    %498 = vmatpush.msra.mxu0 0.0
    %499 = vmatpush.msra.mxu0 0.0
    %500 = vmatpush.msra.mxu0 0.0
    %501 = vmatpush.msra.mxu0 0.0
    %502 = vmatpush.msra.mxu0 0.0
    %503 = vmatpush.msra.mxu0 0.0
    %504 = vmatpush.msra.mxu0 %v143
    %505 = vmatpush.msra.mxu0 %v141
    %506 = vmatpush.msra.mxu0 %v139
    %507 = vmatpush.msra.mxu0 %v137
    %508 = vmatmul.f32.gmra.mxu0 %v470
    %v509 = vpop.f32.mrf.mxu0
    %v510 = vadd.f32 %v150, %v509
    %511 = vdwg.mxu0
    %v512 = vadd.f32 %v105, %v490
    %v513 = vmul.f32 %v512, 0.5
    %v514 = vtanh.pop %v513
    %v515 = vmul.f32 %v514, 0.5
    %v516 = vadd.f32 %v515, 0.5
    %v517 = vmul.f32 %v516, %v510
    %519 = vrot.lane.b32.xlu0 %v517, 64
    %v520 = vpop.permute.xlu0 %519
    %v522 = vadd.f32 %v91, %v520
    %v523 = vtanh.pop %v522
    %v524 = vsub.f32 %v466, %v523
    %526 = vrot.lane.b32.xlu0 %v524, 96
    %v527 = vpop.permute.xlu0 %526
    %v529 = vmul.f32 %v516, %v527
    %531 = vrot.lane.b32.xlu0 %v529, 32
    %v532 = vpop.permute.xlu0 %531
    %v534 = vadd.f32 %v523, %v532
    %536 = vrot.lane.b32.xlu0 %v534, 64
    %v537 = vpop.permute.xlu0 %536
    %v538 = vsel %vm108, %v537, 0
    %540 = vmatpush.msra.mxu0 0.0
    %541 = vmatpush.msra.mxu0 0.0
    %542 = vmatpush.msra.mxu0 0.0
    %543 = vmatpush.msra.mxu0 0.0
    %544 = vmatpush.msra.mxu0 0.0
    %545 = vmatpush.msra.mxu0 0.0
    %546 = vmatpush.msra.mxu0 0.0
    %547 = vmatpush.msra.mxu0 0.0
    %548 = vmatpush.msra.mxu0 0.0
    %549 = vmatpush.msra.mxu0 0.0
    %550 = vmatpush.msra.mxu0 0.0
    %551 = vmatpush.msra.mxu0 0.0
    %552 = vmatpush.msra.mxu0 %v19
    %553 = vmatpush.msra.mxu0 %v18
    %554 = vmatpush.msra.mxu0 %v17
    %555 = vmatpush.msra.mxu0 %v16
    %556 = vmatmul.f32.gmra.mxu0 %v538
    %v557 = vpop.f32.mrf.mxu0
    %v558 = vadd.f32 0.0, %v557
    %559 = vdwg.mxu0
    %560 = vmatpush.msra.mxu0 0.0
    %561 = vmatpush.msra.mxu0 0.0
    %562 = vmatpush.msra.mxu0 0.0
    %563 = vmatpush.msra.mxu0 0.0
    %564 = vmatpush.msra.mxu0 0.0
    %565 = vmatpush.msra.mxu0 0.0
    %566 = vmatpush.msra.mxu0 0.0
    %567 = vmatpush.msra.mxu0 0.0
    %568 = vmatpush.msra.mxu0 0.0
    %569 = vmatpush.msra.mxu0 0.0
    %570 = vmatpush.msra.mxu0 0.0
    %571 = vmatpush.msra.mxu0 0.0
    %572 = vmatpush.msra.mxu0 %v143
    %573 = vmatpush.msra.mxu0 %v141
    %574 = vmatpush.msra.mxu0 %v139
    %575 = vmatpush.msra.mxu0 %v137
    %576 = vmatmul.f32.gmra.mxu0 %v538
    %v577 = vpop.f32.mrf.mxu0
    %v578 = vadd.f32 %v150, %v577
    %579 = vdwg.mxu0
    %v580 = vadd.f32 %v106, %v558
    %v581 = vmul.f32 %v580, 0.5
    %v582 = vtanh.pop %v581
    %v583 = vmul.f32 %v582, 0.5
    %v584 = vadd.f32 %v583, 0.5
    %v585 = vmul.f32 %v584, %v578
    %587 = vrot.lane.b32.xlu0 %v585, 64
    %v588 = vpop.permute.xlu0 %587
    %v590 = vadd.f32 %v94, %v588
    %v591 = vtanh.pop %v590
    %v592 = vsub.f32 %v534, %v591
    %594 = vrot.lane.b32.xlu0 %v592, 96
    %v595 = vpop.permute.xlu0 %594
    %v597 = vmul.f32 %v584, %v595
    %599 = vrot.lane.b32.xlu0 %v597, 32
    %v600 = vpop.permute.xlu0 %599
    %v602 = vadd.f32 %v591, %v600
    %604 = vrot.lane.b32.xlu0 %v602, 64
    %v605 = vpop.permute.xlu0 %604
    %v606 = vsel %vm108, %v605, 0
    %608 = vmatpush.msra.mxu0 0.0
    %609 = vmatpush.msra.mxu0 0.0
    %610 = vmatpush.msra.mxu0 0.0
    %611 = vmatpush.msra.mxu0 0.0
    %612 = vmatpush.msra.mxu0 0.0
    %613 = vmatpush.msra.mxu0 0.0
    %614 = vmatpush.msra.mxu0 0.0
    %615 = vmatpush.msra.mxu0 0.0
    %616 = vmatpush.msra.mxu0 0.0
    %617 = vmatpush.msra.mxu0 0.0
    %618 = vmatpush.msra.mxu0 0.0
    %619 = vmatpush.msra.mxu0 0.0
    %620 = vmatpush.msra.mxu0 %v19
    %621 = vmatpush.msra.mxu0 %v18
    %622 = vmatpush.msra.mxu0 %v17
    %623 = vmatpush.msra.mxu0 %v16
    %624 = vmatmul.f32.gmra.mxu0 %v606
    %v625 = vpop.f32.mrf.mxu0
    %v626 = vadd.f32 0.0, %v625
    %627 = vdwg.mxu0
    %628 = vmatpush.msra.mxu0 0.0
    %629 = vmatpush.msra.mxu0 0.0
    %630 = vmatpush.msra.mxu0 0.0
    %631 = vmatpush.msra.mxu0 0.0
    %632 = vmatpush.msra.mxu0 0.0
    %633 = vmatpush.msra.mxu0 0.0
    %634 = vmatpush.msra.mxu0 0.0
    %635 = vmatpush.msra.mxu0 0.0
    %636 = vmatpush.msra.mxu0 0.0
    %637 = vmatpush.msra.mxu0 0.0
    %638 = vmatpush.msra.mxu0 0.0
    %639 = vmatpush.msra.mxu0 0.0
    %640 = vmatpush.msra.mxu0 %v143
    %641 = vmatpush.msra.mxu0 %v141
    %642 = vmatpush.msra.mxu0 %v139
    %643 = vmatpush.msra.mxu0 %v137
    %644 = vmatmul.f32.gmra.mxu0 %v606
    %v645 = vpop.f32.mrf.mxu0
    %v646 = vadd.f32 %v150, %v645
    %647 = vdwg.mxu0
    %v648 = vadd.f32 %v107, %v626
    %v649 = vmul.f32 %v648, 0.5
    %v650 = vtanh.pop %v649
    %v651 = vmul.f32 %v650, 0.5
    %v652 = vadd.f32 %v651, 0.5
    %v653 = vmul.f32 %v652, %v646
    %655 = vrot.lane.b32.xlu0 %v653, 64
    %v656 = vpop.permute.xlu0 %655
    %v658 = vadd.f32 %v97, %v656
    %v659 = vtanh.pop %v658
    %v660 = vsub.f32 %v602, %v659
    %662 = vrot.lane.b32.xlu0 %v660, 96
    %v663 = vpop.permute.xlu0 %662
    %v665 = vmul.f32 %v652, %v663
    %667 = vrot.lane.b32.xlu0 %v665, 32
    %v668 = vpop.permute.xlu0 %667
    %v670 = vadd.f32 %v659, %v668
    %v671 = vperm.slane %v22, 0
    %672 = vmatpush.msra.mxu0 0.0
    %673 = vmatpush.msra.mxu0 0.0
    %674 = vmatpush.msra.mxu0 0.0
    %675 = vmatpush.msra.mxu0 0.0
    %676 = vmatpush.msra.mxu0 0.0
    %677 = vmatpush.msra.mxu0 0.0
    %678 = vmatpush.msra.mxu0 0.0
    %679 = vmatpush.msra.mxu0 0.0
    %680 = vmatpush.msra.mxu0 0.0
    %681 = vmatpush.msra.mxu0 0.0
    %682 = vmatpush.msra.mxu0 0.0
    %683 = vmatpush.msra.mxu0 0.0
    %684 = vmatpush.msra.mxu0 0.0
    %685 = vmatpush.msra.mxu0 0.0
    %686 = vmatpush.msra.mxu0 %v15
    %687 = vmatpush.msra.mxu0 %v14
    %688 = vmatmul.f32.gmra.mxu0 %v56
    %v689 = vpop.f32.mrf.mxu0
    %v690 = vadd.f32 %v671, %v689
    %691 = vdwg.mxu0
    %v692 = vperm.slane %v23, 0
    %v693 = vadd.f32 %v690, %v692
    %v694 = vmul.f32 %v693, 0.5
    %v695 = vtanh.pop %v694
    %v696 = vmul.f32 %v695, 0.5
    %v697 = vadd.f32 %v696, 0.5
    %699 = vrot.lane.b32.xlu0 %v692, 64
    %v700 = vpop.permute.xlu0 %699
    %v702 = vmul.f32 %v697, %v700
    %704 = vrot.lane.b32.xlu0 %v702, 64
    %v705 = vpop.permute.xlu0 %704
    %v707 = vadd.f32 %v690, %v705
    %v708 = vtanh.pop %v707
    %710 = vrot.lane.b32.xlu0 %v708, 96
    %v711 = vpop.permute.xlu0 %710
    %v713 = vmul.f32 %v697, %v711
    %715 = vrot.lane.b32.xlu0 %v713, 32
    %v716 = vpop.permute.xlu0 %715
    %v718 = vsub.f32 %v708, %v716
    %720 = vrot.lane.b32.xlu0 %v718, 64
    %v721 = vpop.permute.xlu0 %720
    %722 = vrot.lane.b32.xlu0 %v16, 28
    %v723 = vpop.permute.xlu0 %722
    %724 = vrot.lane.b32.xlu0 %v17, 28
    %v725 = vpop.permute.xlu0 %724
    %726 = vrot.lane.b32.xlu0 %v18, 28
    %v727 = vpop.permute.xlu0 %726
    %728 = vrot.lane.b32.xlu0 %v19, 28
    %v729 = vpop.permute.xlu0 %728
    %v734 = vsel %vm108, %v721, 0
    %736 = vmatpush.msra.mxu0 0.0
    %737 = vmatpush.msra.mxu0 0.0
    %738 = vmatpush.msra.mxu0 0.0
    %739 = vmatpush.msra.mxu0 0.0
    %740 = vmatpush.msra.mxu0 0.0
    %741 = vmatpush.msra.mxu0 0.0
    %742 = vmatpush.msra.mxu0 0.0
    %743 = vmatpush.msra.mxu0 0.0
    %744 = vmatpush.msra.mxu0 0.0
    %745 = vmatpush.msra.mxu0 0.0
    %746 = vmatpush.msra.mxu0 0.0
    %747 = vmatpush.msra.mxu0 0.0
    %748 = vmatpush.msra.mxu0 %v729
    %749 = vmatpush.msra.mxu0 %v727
    %750 = vmatpush.msra.mxu0 %v725
    %751 = vmatpush.msra.mxu0 %v723
    %752 = vmatmul.f32.gmra.mxu0 %v734
    %v753 = vpop.f32.mrf.mxu0
    %v754 = vadd.f32 0.0, %v753
    %755 = vdwg.mxu0
    %757 = vrot.lane.b32.xlu0 %v670, 64
    %v758 = vpop.permute.xlu0 %757
    %759 = vrot.lane.b32.xlu0 %v16, 32
    %v760 = vpop.permute.xlu0 %759
    %761 = vrot.lane.b32.xlu0 %v17, 32
    %v762 = vpop.permute.xlu0 %761
    %763 = vrot.lane.b32.xlu0 %v18, 32
    %v764 = vpop.permute.xlu0 %763
    %765 = vrot.lane.b32.xlu0 %v19, 32
    %v766 = vpop.permute.xlu0 %765
    %v771 = vsel %vm108, %v758, 0
    %773 = vmatpush.msra.mxu0 0.0
    %774 = vmatpush.msra.mxu0 0.0
    %775 = vmatpush.msra.mxu0 0.0
    %776 = vmatpush.msra.mxu0 0.0
    %777 = vmatpush.msra.mxu0 0.0
    %778 = vmatpush.msra.mxu0 0.0
    %779 = vmatpush.msra.mxu0 0.0
    %780 = vmatpush.msra.mxu0 0.0
    %781 = vmatpush.msra.mxu0 0.0
    %782 = vmatpush.msra.mxu0 0.0
    %783 = vmatpush.msra.mxu0 0.0
    %784 = vmatpush.msra.mxu0 0.0
    %785 = vmatpush.msra.mxu0 %v766
    %786 = vmatpush.msra.mxu0 %v764
    %787 = vmatpush.msra.mxu0 %v762
    %788 = vmatpush.msra.mxu0 %v760
    %789 = vmatmul.f32.gmra.mxu0 %v771
    %v790 = vpop.f32.mrf.mxu0
    %v791 = vadd.f32 %v754, %v790
    %792 = vdwg.mxu0
    %794 = vrot.lane.b32.xlu0 %v32, 32
    %v795 = vpop.permute.xlu0 %794
    %v797 = vadd.f32 %v791, %v795
    %vm798 = vcmask 25600
    %799 = vst.msk [vmem:[#allocation2] sm:$0x3] %vm798, %v797
    // Predicated region
    $region10: #{bigru_forward.1} parent=1 // pred_check
      _
    $region11: #{bigru_forward.1} parent=1 // pred_check_branch
      %801 = sbr.rel (0) target = $region13
    $region12: #{bigru_forward.1} parent=1 // pred_region
      %803 = vsyncadd [#allocation3], 0
      %s805 = sshll.u32 [#allocation2], 4
      %s806 = int_to_ptr.vmem [resolvable:$true] %s805
      %s807 = sshll.u32 %s2, 4
      %s808 = int_to_ptr.hbm [resolvable:$true] %s807
      %810 = dma.vmem_to_hbm [thread:$0]  %s806, 32, %s808, [#allocation3]
    $region13: #{bigru_forward.1} parent=1 // pred_fallthru
      _
    // Predicated region
    $region14: #{bigru_forward.1} parent=1 // pred_check
      _
    $region15: #{bigru_forward.1} parent=1 // pred_check_branch
      %812 = sbr.rel (0) target = $region17
    $region16: #{bigru_forward.1} parent=1 // pred_region
      %814 = dma.done [#allocation3], 32
    $region17: #{bigru_forward.1} parent=1 // pred_fallthru
      _
    %815 = vsyncpa [#allocation3], 1

</llo_original>
